<compile_context>
chip_gen: v7x
topology: tpu7x:2x2x1
jax: 0.10.0
libtpu: 0.0.40
codegen_flags: <defaults>
</compile_context>

<pallas_src>
import functools

import jax
import jax.numpy as jnp
from jax import lax
from jax.experimental import pallas as pl
from jax.experimental.pallas import tpu as pltpu


_CONTRACT_LAST = (((1,), (1,)), ((), ()))   # A (m, d) . B (n, d) -> A @ B^T


def _round_up(x, m):
    return ((x + m - 1) // m) * m


def _choose_tile(s, target):
    """Returns (tile, padded_extent) with tile | padded_extent."""
    s8 = _round_up(s, 8)
    if s8 <= target:
        return s8, s8
    return target, _round_up(s, target)


def _attn_block_kernel(q_ref, k_ref, v_ref,
                       wq_ref, bq_ref, wk_ref, bk_ref, wv_ref, bv_ref,
                       o_ref, qt_ref, acc_ref, *kv_cache,
                       kv_tile, kv_len, mask_kv, cache_kv):
    qi = pl.program_id(1)
    kv = pl.program_id(2)
    off = pl.multiple_of(kv * kv_tile, kv_tile)

    @pl.when(kv == 0)
    def _():
        acc_ref[...] = jnp.zeros_like(acc_ref)
        # Q projection (q @ Wq^T + bq), cached across kv tiles in bf16.
        qt = lax.dot_general(q_ref[0], wq_ref[...], _CONTRACT_LAST,
                             preferred_element_type=jnp.float32) + bq_ref[...]
        qt_ref[...] = qt.astype(jnp.bfloat16)

    def project_kv():
        kt = (lax.dot_general(k_ref[0], wk_ref[...], _CONTRACT_LAST,
                              preferred_element_type=jnp.float32)
              + bk_ref[...]).astype(jnp.bfloat16)
        vt = (lax.dot_general(v_ref[0], wv_ref[...], _CONTRACT_LAST,
                              preferred_element_type=jnp.float32)
              + bv_ref[...]).astype(jnp.bfloat16)
        if mask_kv:
            # Padded key/value rows project to the bias (nonzero) -> zero the
            # padded V rows so they contribute nothing to attn @ V.
            row = off + lax.broadcasted_iota(jnp.int32, (kv_tile, 1), 0)
            vt = jnp.where(row < kv_len, vt, jnp.zeros_like(vt))
        return kt, vt

    if cache_kv:
        kproj_ref, vproj_ref = kv_cache

        @pl.when(qi == 0)
        def _():
            kt_new, vt_new = project_kv()
            kproj_ref[pl.ds(off, kv_tile), :] = kt_new
            vproj_ref[pl.ds(off, kv_tile), :] = vt_new

        kt = kproj_ref[pl.ds(off, kv_tile), :]
        vt = vproj_ref[pl.ds(off, kv_tile), :]
    else:
        kt, vt = project_kv()

    # scores = Qt @ Kt^T without materializing the transpose.
    scores = lax.dot_general(qt_ref[...], kt, _CONTRACT_LAST,
                             preferred_element_type=jnp.float32)
    attn = jnp.maximum(scores, 0.0)
    acc_ref[...] += jnp.dot(attn.astype(jnp.bfloat16), vt,
                            preferred_element_type=jnp.float32)

    @pl.when(kv == pl.num_programs(2) - 1)
    def _():
        o_ref[0] = acc_ref[...].astype(o_ref.dtype)


def attn_block(query, key, value, params):
    """query: [B, Sq, D]; key/value: [B, Skv, D].

    params hold torch.nn.Linear layout: w* of shape (out=D, in=D), b* of (D,).
    """
    B, Sq, D = query.shape
    Bk, Skv, Dk = key.shape
    assert value.shape == key.shape and Bk == B and Dk == D
    out_dtype = query.dtype

    tq, sq_pad = _choose_tile(Sq, 256)
    tk, skv_pad = _choose_tile(Skv, 512)
    d_pad = _round_up(D, 128)

    num_q = sq_pad // tq
    num_kv = skv_pad // tk

    # Cache projected K/V across q-tiles when there is actual reuse and the
    # cache fits comfortably in VMEM.  This removes the O(num_q) redundant
    # K/V projection matmuls (and their DMAs) of a naively fused kernel.
    cache_bytes = 2 * skv_pad * d_pad * 2          # K_proj + V_proj in bf16
    cache_kv = (num_q > 1) and (cache_bytes <= 16 * 1024 * 1024)

    def pad3(x, s_pad):
        return jnp.pad(x, ((0, 0), (0, s_pad - x.shape[1]), (0, d_pad - D))
                       ).astype(jnp.bfloat16)

    def pad_w(w):          # keep torch (out, in) layout; contraction does "^T"
        return jnp.pad(w, ((0, d_pad - D), (0, d_pad - D))).astype(jnp.bfloat16)

    def pad_b(b):
        return jnp.pad(b, ((0, d_pad - D),)).reshape(1, d_pad).astype(jnp.float32)

    q_p = pad3(query, sq_pad)
    k_p = pad3(key, skv_pad)
    v_p = pad3(value, skv_pad)
    wq, wk, wv = pad_w(params["wq"]), pad_w(params["wk"]), pad_w(params["wv"])
    bq, bk, bv = pad_b(params["bq"]), pad_b(params["bk"]), pad_b(params["bv"])

    grid = (B, num_q, num_kv)

    q_spec = pl.BlockSpec((1, tq, d_pad), lambda b, i, j: (b, i, 0))
    if cache_kv:
        # K/V input tiles are only read on the qi == 0 pass; pin the block
        # index afterwards so the pipeline stops re-DMA-ing unused tiles.
        kv_spec = pl.BlockSpec((1, tk, d_pad),
                               lambda b, i, j: (b, jnp.where(i == 0, j, 0), 0))
    else:
        kv_spec = pl.BlockSpec((1, tk, d_pad), lambda b, i, j: (b, j, 0))
    w_spec = pl.BlockSpec((d_pad, d_pad), lambda b, i, j: (0, 0))
    b_spec = pl.BlockSpec((1, d_pad), lambda b, i, j: (0, 0))
    o_spec = pl.BlockSpec((1, tq, d_pad), lambda b, i, j: (b, i, 0))

    scratch_shapes = [pltpu.VMEM((tq, d_pad), jnp.bfloat16),   # cached Q proj
                      pltpu.VMEM((tq, d_pad), jnp.float32)]    # f32 accumulator
    if cache_kv:
        scratch_shapes += [pltpu.VMEM((skv_pad, d_pad), jnp.bfloat16),  # K proj
                           pltpu.VMEM((skv_pad, d_pad), jnp.bfloat16)]  # V proj

    kernel = functools.partial(_attn_block_kernel, kv_tile=tk, kv_len=Skv,
                               mask_kv=(skv_pad != Skv), cache_kv=cache_kv)

    # With the K/V cache the q-tile axis carries state (filled at qi == 0), so
    # only the batch axis may be split across cores.
    if cache_kv:
        dims = ("parallel", "arbitrary", "arbitrary")
    else:
        dims = ("parallel", "parallel", "arbitrary")

    # Rough VMEM budget: double-buffered q/k/v/out tiles + weights/biases
    # + scratch (+ K/V cache), 2x headroom, clamped under v7x's 64 MiB.
    est = (2 * (tq + 2 * tk) * d_pad * 2                # q/k/v tiles (bf16), 2-buffered
           + 2 * tq * d_pad * 4                         # output tile, 2-buffered
           + 2 * 3 * (d_pad * d_pad * 2 + d_pad * 4)    # weights (bf16) + biases (f32)
           + tq * d_pad * (2 + 4)                       # Q cache + f32 accumulator
           + (cache_bytes if cache_kv else 0))
    vmem_limit = int(min(max(2 * est, 32 * 1024 * 1024), 56 * 1024 * 1024))

    out_padded = pl.pallas_call(
        kernel,
        out_shape=jax.ShapeDtypeStruct((B, sq_pad, d_pad), out_dtype),
        grid_spec=pltpu.PrefetchScalarGridSpec(
            num_scalar_prefetch=0,
            grid=grid,
            in_specs=[q_spec, kv_spec, kv_spec,
                      w_spec, b_spec, w_spec, b_spec, w_spec, b_spec],
            out_specs=o_spec,
            scratch_shapes=scratch_shapes,
        ),
        compiler_params=pltpu.CompilerParams(
            dimension_semantics=dims,
            vmem_limit_bytes=vmem_limit),
    )(q_p, k_p, v_p, wq, bq, wk, bk, wv, bv)

    return out_padded[:, :Sq, :D]


def attn_block_ref(query, key, value, params):
    qt = query @ params["wq"].T + params["bq"]
    kt = key @ params["wk"].T + params["bk"]
    vt = value @ params["wv"].T + params["bv"]
    scores = qt @ jnp.swapaxes(kt, -2, -1)
    return jnp.maximum(scores, 0.0) @ vt


def _rel_err(a, b):
    a = a.astype(jnp.float32)
    b = b.astype(jnp.float32)
    return jnp.linalg.norm(a - b) / (jnp.linalg.norm(b) + 1e-12)


def _make_params(key, d):
    # Same shapes as torch.nn.Linear(d, d): weight (out, in), bias (out,),
    # uniform in [-1/sqrt(d), 1/sqrt(d)].
    bound = 1.0 / (d ** 0.5)
    ks = jax.random.split(key, 6)
    names = ["wq", "bq", "wk", "bk", "wv", "bv"]
    shapes = [(d, d), (d,), (d, d), (d,), (d, d), (d,)]
    return {n: jax.random.uniform(k, s, jnp.float32, -bound, bound)
            for n, k, s in zip(names, ks, shapes)}


if __name__ == "__main__":
    keys = jax.random.split(jax.random.PRNGKey(0), 8)

    # --- small smoke test (single-tile path) --------------------------------
    B, S, D = 2, 8, 32
    query = jax.random.normal(keys[0], (B, S, D), dtype=jnp.float32)
    key_in = jax.random.normal(keys[1], (B, S, D), dtype=jnp.float32)
    value = jax.random.normal(keys[2], (B, S, D), dtype=jnp.float32)
    params = _make_params(keys[3], D)

    out = jax.block_until_ready(attn_block(query, key_in, value, params))
    ref = attn_block_ref(query, key_in, value, params)
    assert out.shape == (B, S, D)
    # bf16 MXU operands with f32 accumulation: relative-norm check vs f32 ref.
    assert float(_rel_err(out, ref)) < 2e-2, "small-shape mismatch vs reference"

    # --- multi-tile test (exercises K/V cache, kv accumulation, padding) ----
    B2, Sq2, Skv2, D2 = 2, 300, 600, 32
    q2 = jax.random.normal(keys[4], (B2, Sq2, D2), dtype=jnp.float32)
    k2 = jax.random.normal(keys[5], (B2, Skv2, D2), dtype=jnp.float32)
    v2 = jax.random.normal(keys[6], (B2, Skv2, D2), dtype=jnp.float32)
    params2 = _make_params(keys[7], D2)

    out2 = jax.block_until_ready(attn_block(q2, k2, v2, params2))
    ref2 = attn_block_ref(q2, k2, v2, params2)
    assert out2.shape == (B2, Sq2, D2)
    assert float(_rel_err(out2, ref2)) < 2e-2, "multi-tile mismatch vs reference"

    print("KERNEL_OK")
</pallas_src>

<mosaic_0001>
module attributes {stable_mosaic.version = 11 : i64} {
  func.func @_attn_block_kernel(%arg0: i32, %arg1: i32, %arg2: i32, %arg3: memref<1x8x128xbf16, #tpu.memory_space<vmem>>, %arg4: memref<1x8x128xbf16, #tpu.memory_space<vmem>>, %arg5: memref<1x8x128xbf16, #tpu.memory_space<vmem>>, %arg6: memref<128x128xbf16, #tpu.memory_space<vmem>>, %arg7: memref<1x128xf32, #tpu.memory_space<vmem>>, %arg8: memref<128x128xbf16, #tpu.memory_space<vmem>>, %arg9: memref<1x128xf32, #tpu.memory_space<vmem>>, %arg10: memref<128x128xbf16, #tpu.memory_space<vmem>>, %arg11: memref<1x128xf32, #tpu.memory_space<vmem>>, %arg12: memref<1x8x128xf32, #tpu.memory_space<vmem>>, %arg13: memref<8x128xbf16, #tpu.memory_space<vmem>>, %arg14: memref<8x128xf32, #tpu.memory_space<vmem>>) attributes {dimension_semantics = [#tpu.dimension_semantics<parallel>, #tpu.dimension_semantics<parallel>, #tpu.dimension_semantics<arbitrary>], iteration_bounds = array<i64: 2, 1, 1>, scalar_prefetch = 0 : i64, scratch_operands = 2 : i64, tpu.core_type = #tpu.core_type<tc>, window_params = [{transform_indices = @transform_0, window_bounds = array<i64: 1, 8, 128>}, {transform_indices = @transform_1, window_bounds = array<i64: 1, 8, 128>}, {transform_indices = @transform_2, window_bounds = array<i64: 1, 8, 128>}, {pipeline_mode = #tpu.pipeline_mode<synchronous>, transform_indices = @transform_3, window_bounds = array<i64: 128, 128>}, {pipeline_mode = #tpu.pipeline_mode<synchronous>, transform_indices = @transform_4, window_bounds = array<i64: 1, 128>}, {pipeline_mode = #tpu.pipeline_mode<synchronous>, transform_indices = @transform_5, window_bounds = array<i64: 128, 128>}, {pipeline_mode = #tpu.pipeline_mode<synchronous>, transform_indices = @transform_6, window_bounds = array<i64: 1, 128>}, {pipeline_mode = #tpu.pipeline_mode<synchronous>, transform_indices = @transform_7, window_bounds = array<i64: 128, 128>}, {pipeline_mode = #tpu.pipeline_mode<synchronous>, transform_indices = @transform_8, window_bounds = array<i64: 1, 128>}, {transform_indices = @transform_9, window_bounds = array<i64: 1, 8, 128>}]} {
    %c0_i32 = arith.constant 0 : i32
    %0 = arith.cmpi eq, %arg2, %c0_i32 : i32
    %1 = arith.extui %0 : i1 to i32
    %c0_i32_0 = arith.constant 0 : i32
    %2 = arith.cmpi ne, %1, %c0_i32_0 : i32
    scf.if %2 {
      %cst_26 = arith.constant 0.000000e+00 : f32
      %31 = vector.broadcast %cst_26 : f32 to vector<8x128xf32>
      %c0_27 = arith.constant 0 : index
      %c0_28 = arith.constant 0 : index
      %32 = vector.load %arg14[%c0_27, %c0_28] : memref<8x128xf32, #tpu.memory_space<vmem>>, vector<8x128xf32>
      tpu.vector_store %arg14[%c0_27, %c0_28], %31 {strides = array<i32>} : memref<8x128xf32, #tpu.memory_space<vmem>>, vector<8x128xf32>,
      %c0_29 = arith.constant 0 : index
      %c0_30 = arith.constant 0 : index
      %c0_31 = arith.constant 0 : index
      %33 = vector.load %arg3[%c0_29, %c0_30, %c0_31] : memref<1x8x128xbf16, #tpu.memory_space<vmem>>, vector<1x8x128xbf16>
      %34 = vector.shape_cast %33 : vector<1x8x128xbf16> to vector<8x128xbf16>
      %c0_32 = arith.constant 0 : index
      %c0_33 = arith.constant 0 : index
      %35 = vector.load %arg6[%c0_32, %c0_33] : memref<128x128xbf16, #tpu.memory_space<vmem>>, vector<128x128xbf16>
      %cst_34 = arith.constant dense<0.000000e+00> : vector<8x128xf32>
      %36 = tpu.matmul %34, %35, %cst_34 {dimension_numbers = #tpu.dot_dimension_numbers<[1], [1], [0], [0], [0, 0, 1, 0], [], []>} : vector<8x128xbf16>, vector<128x128xbf16>, vector<8x128xf32> -> vector<8x128xf32>
      %c0_35 = arith.constant 0 : index
      %c0_36 = arith.constant 0 : index
      %37 = vector.load %arg7[%c0_35, %c0_36] : memref<1x128xf32, #tpu.memory_space<vmem>>, vector<1x128xf32>
      %38 = vector.broadcast %37 : vector<1x128xf32> to vector<8x128xf32>
      %39 = arith.addf %36, %38 : vector<8x128xf32>
      %40 = arith.truncf %39 : vector<8x128xf32> to vector<8x128xbf16>
      %c0_37 = arith.constant 0 : index
      %c0_38 = arith.constant 0 : index
      %41 = vector.load %arg13[%c0_37, %c0_38] : memref<8x128xbf16, #tpu.memory_space<vmem>>, vector<8x128xbf16>
      tpu.vector_store %arg13[%c0_37, %c0_38], %40 {strides = array<i32>} : memref<8x128xbf16, #tpu.memory_space<vmem>>, vector<8x128xbf16>,
    } else {
    }
    %c0 = arith.constant 0 : index
    %c0_1 = arith.constant 0 : index
    %c0_2 = arith.constant 0 : index
    %3 = vector.load %arg4[%c0, %c0_1, %c0_2] : memref<1x8x128xbf16, #tpu.memory_space<vmem>>, vector<1x8x128xbf16>
    %4 = vector.shape_cast %3 : vector<1x8x128xbf16> to vector<8x128xbf16>
    %c0_3 = arith.constant 0 : index
    %c0_4 = arith.constant 0 : index
    %5 = vector.load %arg8[%c0_3, %c0_4] : memref<128x128xbf16, #tpu.memory_space<vmem>>, vector<128x128xbf16>
    %cst = arith.constant dense<0.000000e+00> : vector<8x128xf32>
    %6 = tpu.matmul %4, %5, %cst {dimension_numbers = #tpu.dot_dimension_numbers<[1], [1], [0], [0], [0, 0, 1, 0], [], []>} : vector<8x128xbf16>, vector<128x128xbf16>, vector<8x128xf32> -> vector<8x128xf32>
    %c0_5 = arith.constant 0 : index
    %c0_6 = arith.constant 0 : index
    %7 = vector.load %arg9[%c0_5, %c0_6] : memref<1x128xf32, #tpu.memory_space<vmem>>, vector<1x128xf32>
    %8 = vector.broadcast %7 : vector<1x128xf32> to vector<8x128xf32>
    %9 = arith.addf %6, %8 : vector<8x128xf32>
    %10 = arith.truncf %9 : vector<8x128xf32> to vector<8x128xbf16>
    %c0_7 = arith.constant 0 : index
    %c0_8 = arith.constant 0 : index
    %c0_9 = arith.constant 0 : index
    %11 = vector.load %arg5[%c0_7, %c0_8, %c0_9] : memref<1x8x128xbf16, #tpu.memory_space<vmem>>, vector<1x8x128xbf16>
    %12 = vector.shape_cast %11 : vector<1x8x128xbf16> to vector<8x128xbf16>
    %c0_10 = arith.constant 0 : index
    %c0_11 = arith.constant 0 : index
    %13 = vector.load %arg10[%c0_10, %c0_11] : memref<128x128xbf16, #tpu.memory_space<vmem>>, vector<128x128xbf16>
    %cst_12 = arith.constant dense<0.000000e+00> : vector<8x128xf32>
    %14 = tpu.matmul %12, %13, %cst_12 {dimension_numbers = #tpu.dot_dimension_numbers<[1], [1], [0], [0], [0, 0, 1, 0], [], []>} : vector<8x128xbf16>, vector<128x128xbf16>, vector<8x128xf32> -> vector<8x128xf32>
    %c0_13 = arith.constant 0 : index
    %c0_14 = arith.constant 0 : index
    %15 = vector.load %arg11[%c0_13, %c0_14] : memref<1x128xf32, #tpu.memory_space<vmem>>, vector<1x128xf32>
    %16 = vector.broadcast %15 : vector<1x128xf32> to vector<8x128xf32>
    %17 = arith.addf %14, %16 : vector<8x128xf32>
    %18 = arith.truncf %17 : vector<8x128xf32> to vector<8x128xbf16>
    %c0_15 = arith.constant 0 : index
    %c0_16 = arith.constant 0 : index
    %19 = vector.load %arg13[%c0_15, %c0_16] : memref<8x128xbf16, #tpu.memory_space<vmem>>, vector<8x128xbf16>
    %cst_17 = arith.constant dense<0.000000e+00> : vector<8x8xf32>
    %20 = tpu.matmul %19, %10, %cst_17 {dimension_numbers = #tpu.dot_dimension_numbers<[1], [1], [0], [0], [0, 0, 1, 0], [], []>} : vector<8x128xbf16>, vector<8x128xbf16>, vector<8x8xf32> -> vector<8x8xf32>
    %cst_18 = arith.constant 0.000000e+00 : f32
    %21 = vector.broadcast %cst_18 : f32 to vector<8x8xf32>
    %22 = arith.maximumf %20, %21 : vector<8x8xf32>
    %c0_19 = arith.constant 0 : index
    %c0_20 = arith.constant 0 : index
    %23 = vector.load %arg14[%c0_19, %c0_20] : memref<8x128xf32, #tpu.memory_space<vmem>>, vector<8x128xf32>
    %24 = arith.truncf %22 : vector<8x8xf32> to vector<8x8xbf16>
    %cst_21 = arith.constant dense<0.000000e+00> : vector<8x128xf32>
    %25 = tpu.matmul %24, %18, %cst_21 {dimension_numbers = #tpu.dot_dimension_numbers<[1], [0], [0], [1], [0, 0, 1, 1], [], []>} : vector<8x8xbf16>, vector<8x128xbf16>, vector<8x128xf32> -> vector<8x128xf32>
    %26 = arith.addf %23, %25 : vector<8x128xf32>
    %c0_22 = arith.constant 0 : index
    %c0_23 = arith.constant 0 : index
    %27 = vector.load %arg14[%c0_22, %c0_23] : memref<8x128xf32, #tpu.memory_space<vmem>>, vector<8x128xf32>
    tpu.vector_store %arg14[%c0_22, %c0_23], %26 {strides = array<i32>} : memref<8x128xf32, #tpu.memory_space<vmem>>, vector<8x128xf32>,
    %c0_i32_24 = arith.constant 0 : i32
    %28 = arith.cmpi eq, %arg2, %c0_i32_24 : i32
    %29 = arith.extui %28 : i1 to i32
    %c0_i32_25 = arith.constant 0 : i32
    %30 = arith.cmpi ne, %29, %c0_i32_25 : i32
    scf.if %30 {
      %c0_26 = arith.constant 0 : index
      %c0_27 = arith.constant 0 : index
      %31 = vector.load %arg14[%c0_26, %c0_27] : memref<8x128xf32, #tpu.memory_space<vmem>>, vector<8x128xf32>
      %c0_28 = arith.constant 0 : index
      %c0_29 = arith.constant 0 : index
      %c0_30 = arith.constant 0 : index
      %32 = vector.load %arg12[%c0_28, %c0_29, %c0_30] : memref<1x8x128xf32, #tpu.memory_space<vmem>>, vector<1x8x128xf32>
      %33 = vector.shape_cast %32 : vector<1x8x128xf32> to vector<8x128xf32>
      %34 = vector.shape_cast %31 : vector<8x128xf32> to vector<1x8x128xf32>
      tpu.vector_store %arg12[%c0_28, %c0_29, %c0_30], %34 {strides = array<i32>} : memref<1x8x128xf32, #tpu.memory_space<vmem>>, vector<1x8x128xf32>,
    } else {
    }
    return
  }
  func.func @transform_0(%arg0: i32, %arg1: i32, %arg2: i32) -> (i32, i32, i32) {
    %c0_i32 = arith.constant 0 : i32
    %c0_i32_0 = arith.constant 0 : i32
    return %arg0, %arg1, %c0_i32 : i32, i32, i32
  }
  func.func @transform_1(%arg0: i32, %arg1: i32, %arg2: i32) -> (i32, i32, i32) {
    %c0_i32 = arith.constant 0 : i32
    %c0_i32_0 = arith.constant 0 : i32
    return %arg0, %arg2, %c0_i32 : i32, i32, i32
  }
  func.func @transform_2(%arg0: i32, %arg1: i32, %arg2: i32) -> (i32, i32, i32) {
    %c0_i32 = arith.constant 0 : i32
    %c0_i32_0 = arith.constant 0 : i32
    return %arg0, %arg2, %c0_i32 : i32, i32, i32
  }
  func.func @transform_3(%arg0: i32, %arg1: i32, %arg2: i32) -> (i32, i32) {
    %c0_i32 = arith.constant 0 : i32
    %c0_i32_0 = arith.constant 0 : i32
    %c0_i32_1 = arith.constant 0 : i32
    return %c0_i32, %c0_i32_0 : i32, i32
  }
  func.func @transform_4(%arg0: i32, %arg1: i32, %arg2: i32) -> (i32, i32) {
    %c0_i32 = arith.constant 0 : i32
    %c0_i32_0 = arith.constant 0 : i32
    %c0_i32_1 = arith.constant 0 : i32
    return %c0_i32, %c0_i32_0 : i32, i32
  }
  func.func @transform_5(%arg0: i32, %arg1: i32, %arg2: i32) -> (i32, i32) {
    %c0_i32 = arith.constant 0 : i32
    %c0_i32_0 = arith.constant 0 : i32
    %c0_i32_1 = arith.constant 0 : i32
    return %c0_i32, %c0_i32_0 : i32, i32
  }
  func.func @transform_6(%arg0: i32, %arg1: i32, %arg2: i32) -> (i32, i32) {
    %c0_i32 = arith.constant 0 : i32
    %c0_i32_0 = arith.constant 0 : i32
    %c0_i32_1 = arith.constant 0 : i32
    return %c0_i32, %c0_i32_0 : i32, i32
  }
  func.func @transform_7(%arg0: i32, %arg1: i32, %arg2: i32) -> (i32, i32) {
    %c0_i32 = arith.constant 0 : i32
    %c0_i32_0 = arith.constant 0 : i32
    %c0_i32_1 = arith.constant 0 : i32
    return %c0_i32, %c0_i32_0 : i32, i32
  }
  func.func @transform_8(%arg0: i32, %arg1: i32, %arg2: i32) -> (i32, i32) {
    %c0_i32 = arith.constant 0 : i32
    %c0_i32_0 = arith.constant 0 : i32
    %c0_i32_1 = arith.constant 0 : i32
    return %c0_i32, %c0_i32_0 : i32, i32
  }
  func.func @transform_9(%arg0: i32, %arg1: i32, %arg2: i32) -> (i32, i32, i32) {
    %c0_i32 = arith.constant 0 : i32
    %c0_i32_0 = arith.constant 0 : i32
    return %arg0, %arg1, %c0_i32 : i32, i32, i32
  }
}

</mosaic_0001>

<llo_original>
// kernel: tpu_custom_call.1
$region0: #{tpu_custom_call.1}
  #allocation0 [shape = 'u32[]', space=smem, size = 0x4, offset = 0x4, fixed_abs, tag = 'smem constant byte address 0x4 - core index']
  #allocation1 [shape = 'u32[144,128]{1,0:T(1,128)}', space=vmem, size = 0x12000, scoped, tag = 'internal scratch']
  #allocation2 [shape = 'bf16[8,128]{1,0:T(8,128)(2,1)}', space=vmem, size = 0x800, scoped, tag = 'scratch operand']
  #allocation3 [shape = 'f32[8,128]{1,0:T(8,128)}', space=vmem, size = 0x1000, scoped, tag = 'scratch operand']
  %s0 = inlined_call_operand.hbm [shape: bf16[2,8,128], index: 0, kind: input, shape index: {}]
  %s1 = inlined_call_operand.hbm [shape: bf16[2,8,128], index: 1, kind: input, shape index: {}]
  %s2 = inlined_call_operand.hbm [shape: bf16[2,8,128], index: 2, kind: input, shape index: {}]
  %s3 = inlined_call_operand.hbm [shape: bf16[128,128], index: 3, kind: input, shape index: {}]
  %s4 = inlined_call_operand.vmem [shape: f32[1,128], index: 4, kind: input, shape index: {}]
  %s5 = inlined_call_operand.hbm [shape: bf16[128,128], index: 5, kind: input, shape index: {}]
  %s6 = inlined_call_operand.vmem [shape: f32[1,128], index: 6, kind: input, shape index: {}]
  %s7 = inlined_call_operand.hbm [shape: bf16[128,128], index: 7, kind: input, shape index: {}]
  %s8 = inlined_call_operand.vmem [shape: f32[1,128], index: 8, kind: input, shape index: {}]
  %s9 = inlined_call_operand.hbm [shape: f32[2,8,128], index: 9, kind: output, shape index: {}]
  %s10 = sld [smem:[#allocation0]]
  $region101: #{tpu_custom_call.1} parent=0
    _
  %s12 = ssub.s32 1, %s10
  %s13 = scalar_select 0, %s12, %s10
  $region1: #{tpu_custom_call.1} parent=0
    #allocation4 [shape = 'u8[4096]{0}', space=vmem, size = 0x1000, scoped, tag = 'input window, operand 0']
    #allocation5 [shape = 's32[2]{0}', space=sflag, size = 0x8, scoped, tag = 'scoped memory for tpu_custom_call.1']
    #allocation6 [shape = 's32[2]{0}', space=sflag, size = 0x8, scoped, tag = 'scoped memory for tpu_custom_call.1']
    #allocation7 [shape = 'u8[4096]{0}', space=vmem, size = 0x1000, scoped, tag = 'input window, operand 1']
    #allocation8 [shape = 's32[2]{0}', space=sflag, size = 0x8, scoped, tag = 'scoped memory for tpu_custom_call.1']
    #allocation9 [shape = 'u8[4096]{0}', space=vmem, size = 0x1000, scoped, tag = 'input window, operand 2']
    #allocation10 [shape = 'u8[32768]{0}', space=vmem, size = 0x8000, scoped, tag = 'input window, operand 3, single buffered']
    #allocation11 [shape = 's32[1]{0}', space=sflag, size = 0x4, scoped, tag = 'scoped memory for tpu_custom_call.1']
    #allocation12 [shape = 'u8[32768]{0}', space=vmem, size = 0x8000, scoped, tag = 'input window, operand 5, single buffered']
    #allocation13 [shape = 'u8[32768]{0}', space=vmem, size = 0x8000, scoped, tag = 'input window, operand 7, single buffered']
    #allocation14 [shape = 's32[1]{0}', space=sflag, size = 0x4, scoped, tag = 'scoped memory for tpu_custom_call.1']
    #allocation15 [shape = 'u8[8192]{0}', space=vmem, size = 0x2000, scoped, tag = 'output window, operand 0']
    %14 = vsyncpa [#allocation5], 0
    %s15 = scalar_lea.sflag [#allocation5], 1
    %16 = vsyncpa %s15, 0
    %17 = vsyncpa [#allocation8], 0
    %s18 = scalar_lea.sflag [#allocation8], 1
    %19 = vsyncpa %s18, 0
    %20 = vsyncpa [#allocation11], 0
    %21 = vsyncpa [#allocation14], 0
    %22 = vsyncpa [#allocation6], 0
    %s23 = scalar_lea.sflag [#allocation6], 1
    %24 = vsyncpa %s23, 0
    loop: start=0, step=1, limit=4
    $region2: #{tpu_custom_call.1} parent=1 // loop_pre_header
      _
    $region3: #{tpu_custom_call.1} parent=1 // loop_header
      %s26 = sphi 0, %s30
      %p27 = scmp.ge.s32.totalorder %s26, 4
      %s33 = sphi 0, %s52
      %s34 = sphi 0, %s48
      %s35 = sphi 0, %s44
      %s36 = sphi 0, %s33
      %s37 = sphi 0, %s34
      %s38 = sphi 0, %s35
      %s39 = sphi 0, %s36
      %s40 = sphi 0, %s37
      %s41 = sphi 0, %s38
      %s57 = sphi 0, %s59
      %s60 = sphi 0, %s57
      %s61 = sphi 0, %s60
      %s77 = sphi 0, %s61
      %s85 = sphi 0, %s87
      %s88 = sphi 0, %s85
      %s89 = sphi 0, %s88
      %s105 = sphi 0, %s89
      %s113 = sphi 0, %s115
      %s116 = sphi 0, %s113
      %s117 = sphi 0, %s116
      %s133 = sphi 0, %s117
      %s137 = sphi 0, %s137
      %s139 = sphi 0, %s137
      %s140 = sphi 0, %s139
      %s154 = sphi 0, %s140
      %s158 = sphi 0, %s158
      %s160 = sphi 0, %s158
      %s161 = sphi 0, %s160
      %s175 = sphi 0, %s161
      %s179 = sphi 0, %s179
      %s181 = sphi 0, %s179
      %s182 = sphi 0, %s181
      %s196 = sphi 0, %s182
      %s200 = sphi 0, %s200
      %s202 = sphi 0, %s200
      %s203 = sphi 0, %s202
      %s217 = sphi 0, %s203
      %s221 = sphi 0, %s221
      %s223 = sphi 0, %s221
      %s224 = sphi 0, %s223
      %s238 = sphi 0, %s224
      %s242 = sphi 0, %s242
      %s244 = sphi 0, %s242
      %s245 = sphi 0, %s244
      %s259 = sphi 0, %s245
      %s267 = sphi 0, %s269
      %s270 = sphi 0, %s267
      %s271 = sphi 0, %s270
      %s287 = sphi 0, %s271
    $region4: #{tpu_custom_call.1} parent=1 // loop_header_branch
      %29 = sbr.rel (%p27) target = $region8
    $region5: #{tpu_custom_call.1} parent=1 // loop_body
      %s31 = ssub.s32 %s26, 1
      %s32 = ssub.s32 %s26, 2
      %s42 = sadd.s32 1, %s35
      %p43 = scmp.ge.s32.totalorder %s42, 1
      %s44 = scalar_select %p43, 0, %s42
      %s45 = sadd.s32 1, %s34
      %s46 = scalar_select %p43, %s45, %s34
      %p47 = scmp.ge.s32.totalorder %s46, 1
      %s48 = scalar_select %p47, 0, %s46
      %s49 = sadd.s32 1, %s33
      %s50 = scalar_select %p47, %s49, %s33
      %p51 = scmp.ge.s32.totalorder %s50, 2
      %s52 = scalar_select %p51, 0, %s50
      %s53 = ssub.s32 %s33, %s52
      %s54 = ssub.s32 %s34, %s48
      %s55 = sor.u32 %s53, %s54
      %p56 = scmp.eq.s32.totalorder %s55, 0
      %s58 = sadd.s32 %s57, 1
      %s59 = scalar_select %p56, %s57, %s58
      %p62 = pneg %p56
      %p63 = scmp.eq.s32.totalorder %s26, 1
      %p64 = por %p62, %p63
      %p65 = scmp.ne.s32.totalorder %s57, %s60
      %p66 = scmp.eq.s32.totalorder %s26, 0
      %p67 = por %p65, %p66
      %p68 = scmp.ne.s32.totalorder %s57, %s60
      %p69 = scmp.eq.s32.totalorder %s31, 1
      %p70 = por %p68, %p69
      %p71 = scmp.ne.s32.totalorder %s60, %s61
      %p72 = scmp.eq.s32.totalorder %s31, 0
      %p73 = por %p71, %p72
      %p74 = scmp.ne.s32.totalorder %s60, %s61
      %p75 = scmp.eq.s32.totalorder %s32, 1
      %p76 = por %p74, %p75
      %p78 = scmp.ne.s32.totalorder %s61, %s77
      %p79 = scmp.eq.s32.totalorder %s32, 0
      %p80 = por %p78, %p79
      %s81 = ssub.s32 %s33, %s52
      %s82 = ssub.s32 %s35, %s44
      %s83 = sor.u32 %s81, %s82
      %p84 = scmp.eq.s32.totalorder %s83, 0
      %s86 = sadd.s32 %s85, 1
      %s87 = scalar_select %p84, %s85, %s86
      %p90 = pneg %p84
      %p91 = scmp.eq.s32.totalorder %s26, 1
      %p92 = por %p90, %p91
      %p93 = scmp.ne.s32.totalorder %s85, %s88
      %p94 = scmp.eq.s32.totalorder %s26, 0
      %p95 = por %p93, %p94
      %p96 = scmp.ne.s32.totalorder %s85, %s88
      %p97 = scmp.eq.s32.totalorder %s31, 1
      %p98 = por %p96, %p97
      %p99 = scmp.ne.s32.totalorder %s88, %s89
      %p100 = scmp.eq.s32.totalorder %s31, 0
      %p101 = por %p99, %p100
      %p102 = scmp.ne.s32.totalorder %s88, %s89
      %p103 = scmp.eq.s32.totalorder %s32, 1
      %p104 = por %p102, %p103
      %p106 = scmp.ne.s32.totalorder %s89, %s105
      %p107 = scmp.eq.s32.totalorder %s32, 0
      %p108 = por %p106, %p107
      %s109 = ssub.s32 %s33, %s52
      %s110 = ssub.s32 %s35, %s44
      %s111 = sor.u32 %s109, %s110
      %p112 = scmp.eq.s32.totalorder %s111, 0
      %s114 = sadd.s32 %s113, 1
      %s115 = scalar_select %p112, %s113, %s114
      %p118 = pneg %p112
      %p119 = scmp.eq.s32.totalorder %s26, 1
      %p120 = por %p118, %p119
      %p121 = scmp.ne.s32.totalorder %s113, %s116
      %p122 = scmp.eq.s32.totalorder %s26, 0
      %p123 = por %p121, %p122
      %p124 = scmp.ne.s32.totalorder %s113, %s116
      %p125 = scmp.eq.s32.totalorder %s31, 1
      %p126 = por %p124, %p125
      %p127 = scmp.ne.s32.totalorder %s116, %s117
      %p128 = scmp.eq.s32.totalorder %s31, 0
      %p129 = por %p127, %p128
      %p130 = scmp.ne.s32.totalorder %s116, %s117
      %p131 = scmp.eq.s32.totalorder %s32, 1
      %p132 = por %p130, %p131
      %p134 = scmp.ne.s32.totalorder %s117, %s133
      %p135 = scmp.eq.s32.totalorder %s32, 0
      %p136 = por %p134, %p135
      %s138 = sadd.s32 %s137, 1
      %p141 = scmp.eq.s32.totalorder %s26, 1
      %p142 = scmp.ne.s32.totalorder %s137, %s139
      %p143 = scmp.eq.s32.totalorder %s26, 0
      %p144 = por %p142, %p143
      %p145 = scmp.ne.s32.totalorder %s137, %s139
      %p146 = scmp.eq.s32.totalorder %s31, 1
      %p147 = por %p145, %p146
      %p148 = scmp.ne.s32.totalorder %s139, %s140
      %p149 = scmp.eq.s32.totalorder %s31, 0
      %p150 = por %p148, %p149
      %p151 = scmp.ne.s32.totalorder %s139, %s140
      %p152 = scmp.eq.s32.totalorder %s32, 1
      %p153 = por %p151, %p152
      %p155 = scmp.ne.s32.totalorder %s140, %s154
      %p156 = scmp.eq.s32.totalorder %s32, 0
      %p157 = por %p155, %p156
      %s159 = sadd.s32 %s158, 1
      %p162 = scmp.eq.s32.totalorder %s26, 1
      %p163 = scmp.ne.s32.totalorder %s158, %s160
      %p164 = scmp.eq.s32.totalorder %s26, 0
      %p165 = por %p163, %p164
      %p166 = scmp.ne.s32.totalorder %s158, %s160
      %p167 = scmp.eq.s32.totalorder %s31, 1
      %p168 = por %p166, %p167
      %p169 = scmp.ne.s32.totalorder %s160, %s161
      %p170 = scmp.eq.s32.totalorder %s31, 0
      %p171 = por %p169, %p170
      %p172 = scmp.ne.s32.totalorder %s160, %s161
      %p173 = scmp.eq.s32.totalorder %s32, 1
      %p174 = por %p172, %p173
      %p176 = scmp.ne.s32.totalorder %s161, %s175
      %p177 = scmp.eq.s32.totalorder %s32, 0
      %p178 = por %p176, %p177
      %s180 = sadd.s32 %s179, 1
      %p183 = scmp.eq.s32.totalorder %s26, 1
      %p184 = scmp.ne.s32.totalorder %s179, %s181
      %p185 = scmp.eq.s32.totalorder %s26, 0
      %p186 = por %p184, %p185
      %p187 = scmp.ne.s32.totalorder %s179, %s181
      %p188 = scmp.eq.s32.totalorder %s31, 1
      %p189 = por %p187, %p188
      %p190 = scmp.ne.s32.totalorder %s181, %s182
      %p191 = scmp.eq.s32.totalorder %s31, 0
      %p192 = por %p190, %p191
      %p193 = scmp.ne.s32.totalorder %s181, %s182
      %p194 = scmp.eq.s32.totalorder %s32, 1
      %p195 = por %p193, %p194
      %p197 = scmp.ne.s32.totalorder %s182, %s196
      %p198 = scmp.eq.s32.totalorder %s32, 0
      %p199 = por %p197, %p198
      %s201 = sadd.s32 %s200, 1
      %p204 = scmp.eq.s32.totalorder %s26, 1
      %p205 = scmp.ne.s32.totalorder %s200, %s202
      %p206 = scmp.eq.s32.totalorder %s26, 0
      %p207 = por %p205, %p206
      %p208 = scmp.ne.s32.totalorder %s200, %s202
      %p209 = scmp.eq.s32.totalorder %s31, 1
      %p210 = por %p208, %p209
      %p211 = scmp.ne.s32.totalorder %s202, %s203
      %p212 = scmp.eq.s32.totalorder %s31, 0
      %p213 = por %p211, %p212
      %p214 = scmp.ne.s32.totalorder %s202, %s203
      %p215 = scmp.eq.s32.totalorder %s32, 1
      %p216 = por %p214, %p215
      %p218 = scmp.ne.s32.totalorder %s203, %s217
      %p219 = scmp.eq.s32.totalorder %s32, 0
      %p220 = por %p218, %p219
      %s222 = sadd.s32 %s221, 1
      %p225 = scmp.eq.s32.totalorder %s26, 1
      %p226 = scmp.ne.s32.totalorder %s221, %s223
      %p227 = scmp.eq.s32.totalorder %s26, 0
      %p228 = por %p226, %p227
      %p229 = scmp.ne.s32.totalorder %s221, %s223
      %p230 = scmp.eq.s32.totalorder %s31, 1
      %p231 = por %p229, %p230
      %p232 = scmp.ne.s32.totalorder %s223, %s224
      %p233 = scmp.eq.s32.totalorder %s31, 0
      %p234 = por %p232, %p233
      %p235 = scmp.ne.s32.totalorder %s223, %s224
      %p236 = scmp.eq.s32.totalorder %s32, 1
      %p237 = por %p235, %p236
      %p239 = scmp.ne.s32.totalorder %s224, %s238
      %p240 = scmp.eq.s32.totalorder %s32, 0
      %p241 = por %p239, %p240
      %s243 = sadd.s32 %s242, 1
      %p246 = scmp.eq.s32.totalorder %s26, 1
      %p247 = scmp.ne.s32.totalorder %s242, %s244
      %p248 = scmp.eq.s32.totalorder %s26, 0
      %p249 = por %p247, %p248
      %p250 = scmp.ne.s32.totalorder %s242, %s244
      %p251 = scmp.eq.s32.totalorder %s31, 1
      %p252 = por %p250, %p251
      %p253 = scmp.ne.s32.totalorder %s244, %s245
      %p254 = scmp.eq.s32.totalorder %s31, 0
      %p255 = por %p253, %p254
      %p256 = scmp.ne.s32.totalorder %s244, %s245
      %p257 = scmp.eq.s32.totalorder %s32, 1
      %p258 = por %p256, %p257
      %p260 = scmp.ne.s32.totalorder %s245, %s259
      %p261 = scmp.eq.s32.totalorder %s32, 0
      %p262 = por %p260, %p261
      %s263 = ssub.s32 %s33, %s52
      %s264 = ssub.s32 %s34, %s48
      %s265 = sor.u32 %s263, %s264
      %p266 = scmp.eq.s32.totalorder %s265, 0
      %s268 = sadd.s32 %s267, 1
      %s269 = scalar_select %p266, %s267, %s268
      %p272 = pneg %p266
      %p273 = scmp.eq.s32.totalorder %s26, 1
      %p274 = por %p272, %p273
      %p275 = scmp.ne.s32.totalorder %s267, %s270
      %p276 = scmp.eq.s32.totalorder %s26, 0
      %p277 = por %p275, %p276
      %p278 = scmp.ne.s32.totalorder %s267, %s270
      %p279 = scmp.eq.s32.totalorder %s31, 1
      %p280 = por %p278, %p279
      %p281 = scmp.ne.s32.totalorder %s270, %s271
      %p282 = scmp.eq.s32.totalorder %s31, 0
      %p283 = por %p281, %p282
      %p284 = scmp.ne.s32.totalorder %s270, %s271
      %p285 = scmp.eq.s32.totalorder %s32, 1
      %p286 = por %p284, %p285
      %p288 = scmp.ne.s32.totalorder %s271, %s287
      %p289 = scmp.eq.s32.totalorder %s32, 0
      %p290 = por %p288, %p289
      %p291 = scmp.le.s32.totalorder 1, %s26
      %p292 = scmp.lt.s32.totalorder %s26, 3
      %p293 = pnand %p291, %p292
      %p294 = pneg %p293
      // Predicated region
      $region9: #{tpu_custom_call.1} parent=5 // pred_check
        _
      $region10: #{tpu_custom_call.1} parent=5 // pred_check_branch
        %296 = sbr.rel (%p293) target = $region12
      $region11: #{tpu_custom_call.1} parent=5 // pred_region
        %s297 = ssub.s32 %s26, 1
        // Predicated region
        $region13: #{tpu_custom_call.1} parent=11 // pred_check
          %p298 = pneg %p150
        $region14: #{tpu_custom_call.1} parent=11 // pred_check_branch
          %300 = sbr.rel (%p298) target = $region16
        $region15: #{tpu_custom_call.1} parent=11 // pred_region
          %s302 = ssub.s32 1024, 1024
          %303 = vsyncadd [#allocation11], %s302
          %s304 = sshll.u32 [#allocation10], 4
          %s305 = int_to_ptr.vmem [resolvable:$true] %s304
          %310 = dma.hbm_to_vmem [thread:$0]  %s3, 1024, %s305, [#allocation11], 64, 64, 4
        $region16: #{tpu_custom_call.1} parent=11 // pred_fallthru
          _
        // Predicated region
        $region17: #{tpu_custom_call.1} parent=11 // pred_check
          %p311 = pneg %p171
        $region18: #{tpu_custom_call.1} parent=11 // pred_check_branch
          %313 = sbr.rel (%p311) target = $region20
        $region19: #{tpu_custom_call.1} parent=11 // pred_region
          _
        $region20: #{tpu_custom_call.1} parent=11 // pred_fallthru
          _
        // Predicated region
        $region21: #{tpu_custom_call.1} parent=11 // pred_check
          %p314 = pneg %p192
        $region22: #{tpu_custom_call.1} parent=11 // pred_check_branch
          %316 = sbr.rel (%p314) target = $region24
        $region23: #{tpu_custom_call.1} parent=11 // pred_region
          %s318 = ssub.s32 1024, 1024
          %319 = vsyncadd [#allocation11], %s318
          %s320 = sshll.u32 [#allocation12], 4
          %s321 = int_to_ptr.vmem [resolvable:$true] %s320
          %326 = dma.hbm_to_vmem [thread:$0]  %s5, 1024, %s321, [#allocation11], 64, 64, 4
        $region24: #{tpu_custom_call.1} parent=11 // pred_fallthru
          _
        // Predicated region
        $region25: #{tpu_custom_call.1} parent=11 // pred_check
          %p327 = pneg %p213
        $region26: #{tpu_custom_call.1} parent=11 // pred_check_branch
          %329 = sbr.rel (%p327) target = $region28
        $region27: #{tpu_custom_call.1} parent=11 // pred_region
          _
        $region28: #{tpu_custom_call.1} parent=11 // pred_fallthru
          _
        // Predicated region
        $region29: #{tpu_custom_call.1} parent=11 // pred_check
          %p330 = pneg %p234
        $region30: #{tpu_custom_call.1} parent=11 // pred_check_branch
          %332 = sbr.rel (%p330) target = $region32
        $region31: #{tpu_custom_call.1} parent=11 // pred_region
          %s334 = ssub.s32 1024, 1024
          %335 = vsyncadd [#allocation14], %s334
          %s336 = sshll.u32 [#allocation13], 4
          %s337 = int_to_ptr.vmem [resolvable:$true] %s336
          %342 = dma.hbm_to_vmem [thread:$0]  %s7, 1024, %s337, [#allocation14], 64, 64, 4
        $region32: #{tpu_custom_call.1} parent=11 // pred_fallthru
          _
        // Predicated region
        $region33: #{tpu_custom_call.1} parent=11 // pred_check
          %p343 = pneg %p255
        $region34: #{tpu_custom_call.1} parent=11 // pred_check_branch
          %345 = sbr.rel (%p343) target = $region36
        $region35: #{tpu_custom_call.1} parent=11 // pred_region
          _
        $region36: #{tpu_custom_call.1} parent=11 // pred_fallthru
          _
      $region12: #{tpu_custom_call.1} parent=5 // pred_fallthru
        _
      %p346 = scmp.lt.s32.totalorder %s26, 2
      // Predicated region
      $region37: #{tpu_custom_call.1} parent=5 // pred_check
        %p347 = pneg %p346
      $region38: #{tpu_custom_call.1} parent=5 // pred_check_branch
        %349 = sbr.rel (%p347) target = $region40
      $region39: #{tpu_custom_call.1} parent=5 // pred_region
        // Predicated region
        $region41: #{tpu_custom_call.1} parent=39 // pred_check
          %p350 = pneg %p67
        $region42: #{tpu_custom_call.1} parent=39 // pred_check_branch
          %352 = sbr.rel (%p350) target = $region44
        $region43: #{tpu_custom_call.1} parent=39 // pred_region
          %s353 = sand.u32 %s57, 1
          %s354 = scalar_lea.sflag [#allocation5], %s353
          %s355 = sand.u32 %s57, 1
          %s356 = smul.addr %s355, 4
          %s357 = scalar_lea.vmem [#allocation4], %s356
          %s359 = ssub.s32 64, 64
          %360 = vsyncadd %s354, %s359
          %s361 = sadd.s32 %s34, %s33
          %s362 = smul.addr %s361, 64
          %s363 = scalar_lea.hbm %s0, %s362
          %s365 = sshll.u32 %s357, 4
          %s366 = int_to_ptr.vmem [resolvable:$true] %s365
          %368 = dma.hbm_to_vmem [thread:$0]  %s363, 64, %s366, %s354
        $region44: #{tpu_custom_call.1} parent=39 // pred_fallthru
          _
        // Predicated region
        $region45: #{tpu_custom_call.1} parent=39 // pred_check
          %p369 = pneg %p95
        $region46: #{tpu_custom_call.1} parent=39 // pred_check_branch
          %371 = sbr.rel (%p369) target = $region48
        $region47: #{tpu_custom_call.1} parent=39 // pred_region
          %s372 = sand.u32 %s26, 1
          %s373 = scalar_lea.sflag [#allocation8], %s372
          %s374 = sand.u32 %s85, 1
          %s375 = smul.addr %s374, 4
          %s376 = scalar_lea.vmem [#allocation7], %s375
          %s378 = ssub.s32 64, 64
          %379 = vsyncadd %s373, %s378
          %s380 = sadd.s32 %s35, %s33
          %s381 = smul.addr %s380, 64
          %s382 = scalar_lea.hbm %s1, %s381
          %s384 = sshll.u32 %s376, 4
          %s385 = int_to_ptr.vmem [resolvable:$true] %s384
          %387 = dma.hbm_to_vmem [thread:$0]  %s382, 64, %s385, %s373
        $region48: #{tpu_custom_call.1} parent=39 // pred_fallthru
          _
        // Predicated region
        $region49: #{tpu_custom_call.1} parent=39 // pred_check
          %p388 = pneg %p123
        $region50: #{tpu_custom_call.1} parent=39 // pred_check_branch
          %390 = sbr.rel (%p388) target = $region52
        $region51: #{tpu_custom_call.1} parent=39 // pred_region
          %s391 = sand.u32 %s26, 1
          %s392 = scalar_lea.sflag [#allocation8], %s391
          %s393 = sand.u32 %s113, 1
          %s394 = smul.addr %s393, 4
          %s395 = scalar_lea.vmem [#allocation9], %s394
          %s397 = ssub.s32 64, 64
          %398 = vsyncadd %s392, %s397
          %s399 = sadd.s32 %s35, %s33
          %s400 = smul.addr %s399, 64
          %s401 = scalar_lea.hbm %s2, %s400
          %s403 = sshll.u32 %s395, 4
          %s404 = int_to_ptr.vmem [resolvable:$true] %s403
          %406 = dma.hbm_to_vmem [thread:$0]  %s401, 64, %s404, %s392
        $region52: #{tpu_custom_call.1} parent=39 // pred_fallthru
          _
      $region40: #{tpu_custom_call.1} parent=5 // pred_fallthru
        _
      %p407 = scmp.le.s32.totalorder 1, %s26
      %p408 = scmp.lt.s32.totalorder %s26, 3
      %p409 = pnand %p407, %p408
      %p410 = pneg %p409
      // Predicated region
      $region53: #{tpu_custom_call.1} parent=5 // pred_check
        _
      $region54: #{tpu_custom_call.1} parent=5 // pred_check_branch
        %412 = sbr.rel (%p409) target = $region56
      $region55: #{tpu_custom_call.1} parent=5 // pred_region
        %s413 = ssub.s32 %s26, 1
        %s414 = sand.u32 %s60, 1
        %s415 = scalar_lea.sflag [#allocation5], %s414
        %s416 = sand.u32 %s60, 1
        %s417 = smul.addr %s416, 4
        %s418 = scalar_lea.vmem [#allocation4], %s417
        // Predicated region
        $region57: #{tpu_custom_call.1} parent=55 // pred_check
          %p419 = pneg %p73
        $region58: #{tpu_custom_call.1} parent=55 // pred_check_branch
          %421 = sbr.rel (%p419) target = $region60
        $region59: #{tpu_custom_call.1} parent=55 // pred_region
          %422 = dma.done %s415, 64
        $region60: #{tpu_custom_call.1} parent=55 // pred_fallthru
          _
        %s423 = sand.u32 %s31, 1
        %s424 = scalar_lea.sflag [#allocation8], %s423
        %s425 = sand.u32 %s88, 1
        %s426 = smul.addr %s425, 4
        %s427 = scalar_lea.vmem [#allocation7], %s426
        // Predicated region
        $region61: #{tpu_custom_call.1} parent=55 // pred_check
          %p428 = pneg %p101
        $region62: #{tpu_custom_call.1} parent=55 // pred_check_branch
          %430 = sbr.rel (%p428) target = $region64
        $region63: #{tpu_custom_call.1} parent=55 // pred_region
          %431 = dma.done %s424, 64
        $region64: #{tpu_custom_call.1} parent=55 // pred_fallthru
          _
        %s432 = sand.u32 %s31, 1
        %s433 = scalar_lea.sflag [#allocation8], %s432
        %s434 = sand.u32 %s116, 1
        %s435 = smul.addr %s434, 4
        %s436 = scalar_lea.vmem [#allocation9], %s435
        // Predicated region
        $region65: #{tpu_custom_call.1} parent=55 // pred_check
          %p437 = pneg %p129
        $region66: #{tpu_custom_call.1} parent=55 // pred_check_branch
          %439 = sbr.rel (%p437) target = $region68
        $region67: #{tpu_custom_call.1} parent=55 // pred_region
          %440 = dma.done %s433, 64
        $region68: #{tpu_custom_call.1} parent=55 // pred_fallthru
          _
        // Predicated region
        $region69: #{tpu_custom_call.1} parent=55 // pred_check
          %p441 = pneg %p150
        $region70: #{tpu_custom_call.1} parent=55 // pred_check_branch
          %443 = sbr.rel (%p441) target = $region72
        $region71: #{tpu_custom_call.1} parent=55 // pred_region
          %444 = dma.done [#allocation11], 1024
        $region72: #{tpu_custom_call.1} parent=55 // pred_fallthru
          _
        // Predicated region
        $region73: #{tpu_custom_call.1} parent=55 // pred_check
          %p445 = pneg %p192
        $region74: #{tpu_custom_call.1} parent=55 // pred_check_branch
          %447 = sbr.rel (%p445) target = $region76
        $region75: #{tpu_custom_call.1} parent=55 // pred_region
          %448 = dma.done [#allocation11], 1024
        $region76: #{tpu_custom_call.1} parent=55 // pred_fallthru
          _
        // Predicated region
        $region77: #{tpu_custom_call.1} parent=55 // pred_check
          %p449 = pneg %p234
        $region78: #{tpu_custom_call.1} parent=55 // pred_check_branch
          %451 = sbr.rel (%p449) target = $region80
        $region79: #{tpu_custom_call.1} parent=55 // pred_region
          %452 = dma.done [#allocation14], 1024
        $region80: #{tpu_custom_call.1} parent=55 // pred_fallthru
          _
        %s453 = sand.u32 %s60, 1
        %s454 = scalar_lea.sflag [#allocation5], %s453
        %s455 = sand.u32 %s60, 1
        %s456 = smul.addr %s455, 4
        %s457 = scalar_lea.vmem [#allocation4], %s456
        %p458 = pneg %p73
        %p459 = pneg %p70
        %s460 = sand.u32 %s31, 1
        %s461 = scalar_lea.sflag [#allocation8], %s460
        %s462 = sand.u32 %s88, 1
        %s463 = smul.addr %s462, 4
        %s464 = scalar_lea.vmem [#allocation7], %s463
        %p465 = pneg %p101
        %p466 = pneg %p98
        %s467 = sand.u32 %s31, 1
        %s468 = scalar_lea.sflag [#allocation8], %s467
        %s469 = sand.u32 %s116, 1
        %s470 = smul.addr %s469, 4
        %s471 = scalar_lea.vmem [#allocation9], %s470
        %p472 = pneg %p129
        %p473 = pneg %p126
        %p474 = pneg %p150
        %p475 = pneg %p147
        %p476 = pneg %p171
        %p477 = pneg %p168
        %p478 = pneg %p192
        %p479 = pneg %p189
        %p480 = pneg %p213
        %p481 = pneg %p210
        %p482 = pneg %p234
        %p483 = pneg %p231
        %p484 = pneg %p255
        %p485 = pneg %p252
        %p486 = pneg %p283
        %p487 = pneg %p280
        %s488 = sand.u32 %s270, 1
        %s489 = scalar_lea.sflag [#allocation6], %s488
        %s490 = sand.u32 %s270, 1
        %s491 = smul.addr %s490, 8
        %s492 = scalar_lea.vmem [#allocation15], %s491
        %p494 = scmp.eq.s32.totalorder %s38, 0
        // Predicated region
        $region81: #{tpu_custom_call.1} parent=55 // pred_check
          %p495 = pneg %p494
        $region82: #{tpu_custom_call.1} parent=55 // pred_check_branch
          %497 = sbr.rel (%p495) target = $region84
        $region83: #{tpu_custom_call.1} parent=55 // pred_region
          %498 = vst [vmem:[#allocation3] sm:$0xff] 0.0
          %v499 = vld [vmem:[%s418] sm:$0xf]
          %v500 = vld [vmem:[#allocation10] sm:$0xf]
          %v501 = vld [vmem:[#allocation10 + $0x4] sm:$0xf]
          %v502 = vld [vmem:[#allocation10 + $0x8] sm:$0xf]
          %v503 = vld [vmem:[#allocation10 + $0xc] sm:$0xf]
          %v504 = vld [vmem:[#allocation10 + $0x10] sm:$0xf]
          %v505 = vld [vmem:[#allocation10 + $0x14] sm:$0xf]
          %v506 = vld [vmem:[#allocation10 + $0x18] sm:$0xf]
          %v507 = vld [vmem:[#allocation10 + $0x1c] sm:$0xf]
          %v508 = vld [vmem:[#allocation10 + $0x20] sm:$0xf]
          %v509 = vld [vmem:[#allocation10 + $0x24] sm:$0xf]
          %v510 = vld [vmem:[#allocation10 + $0x28] sm:$0xf]
          %v511 = vld [vmem:[#allocation10 + $0x2c] sm:$0xf]
          %v512 = vld [vmem:[#allocation10 + $0x30] sm:$0xf]
          %v513 = vld [vmem:[#allocation10 + $0x34] sm:$0xf]
          %v514 = vld [vmem:[#allocation10 + $0x38] sm:$0xf]
          %v515 = vld [vmem:[#allocation10 + $0x3c] sm:$0xf]
          %v516 = vld [vmem:[%s4] sm:$0x1]
          %v518 = vlaneseq
          %v519 = vshrl.u32 %v518, 7
          %v520 = vsub.s32 0, %v519
          %v521 = vrot.slane %v516, %v520
          %v539 = vunpack.c.l.b16 %v500
          %v540 = vunpack.c.l.b16 %v501
          %v541 = vunpack.c.l.b16 %v502
          %v542 = vunpack.c.l.b16 %v503
          %v543 = vunpack.c.l.b16 %v504
          %v544 = vunpack.c.l.b16 %v505
          %v545 = vunpack.c.l.b16 %v506
          %v546 = vunpack.c.l.b16 %v507
          %v547 = vunpack.c.l.b16 %v508
          %v548 = vunpack.c.l.b16 %v509
          %v549 = vunpack.c.l.b16 %v510
          %v550 = vunpack.c.l.b16 %v511
          %v551 = vunpack.c.l.b16 %v512
          %v552 = vunpack.c.l.b16 %v513
          %v553 = vunpack.c.l.b16 %v514
          %v554 = vunpack.c.l.b16 %v515
          %v555 = vpack.c.b16 %v540, %v539
          %v556 = vpack.c.b16 %v542, %v541
          %v557 = vpack.c.b16 %v544, %v543
          %v558 = vpack.c.b16 %v546, %v545
          %v559 = vpack.c.b16 %v548, %v547
          %v560 = vpack.c.b16 %v550, %v549
          %v561 = vpack.c.b16 %v552, %v551
          %v562 = vpack.c.b16 %v554, %v553
          %571 = vmatprep.subr.bf16.mxu0 0
          %572 = vmatpush1.bf16.xpose.msra.mxu0 %v555
          %573 = vmatprep.subr.bf16.mxu0 0
          %574 = vmatpush1.bf16.xpose.msra.mxu0 %v556
          %575 = vmatprep.subr.bf16.mxu0 0
          %576 = vmatpush1.bf16.xpose.msra.mxu0 %v557
          %577 = vmatprep.subr.bf16.mxu0 0
          %578 = vmatpush1.bf16.xpose.msra.mxu0 %v558
          %579 = vmatprep.subr.bf16.mxu0 0
          %580 = vmatpush1.bf16.xpose.msra.mxu0 %v559
          %581 = vmatprep.subr.bf16.mxu0 0
          %582 = vmatpush1.bf16.xpose.msra.mxu0 %v560
          %583 = vmatprep.subr.bf16.mxu0 0
          %584 = vmatpush1.bf16.xpose.msra.mxu0 %v561
          %585 = vmatprep.subr.bf16.mxu0 0
          %586 = vmatpush1.bf16.xpose.msra.mxu0 %v562
          %587 = vmatprep.subr.bf16.mxu0 0
          %588 = vmatpush1.bf16.xpose.msra.mxu0 0
          %589 = vmatprep.subr.bf16.mxu0 0
          %590 = vmatpush1.bf16.xpose.msra.mxu0 0
          %591 = vmatprep.subr.bf16.mxu0 0
          %592 = vmatpush1.bf16.xpose.msra.mxu0 0
          %593 = vmatprep.subr.bf16.mxu0 0
          %594 = vmatpush1.bf16.xpose.msra.mxu0 0
          %595 = vmatprep.subr.bf16.mxu0 0
          %596 = vmatpush1.bf16.xpose.msra.mxu0 0
          %597 = vmatprep.subr.bf16.mxu0 0
          %598 = vmatpush1.bf16.xpose.msra.mxu0 0
          %599 = vmatprep.subr.bf16.mxu0 0
          %600 = vmatpush1.bf16.xpose.msra.mxu0 0
          %601 = vmatprep.subr.bf16.mxu0 0
          %602 = vmatpush1.bf16.xpose.msra.mxu0 0
          %603 = vmatprep.mubr.bf16.mxu0 0
          %604 = vmatmul.mubr.bf16.gmra.mrb[0].mxu0 %v499
          %v605 = vpop.f32.mrb[0].mxu0
          %v606 = vadd.f32 %v521, %v605
          %v607 = vpop.f32.mrb[0].mxu0
          %v608 = vpop.f32.mrb[0].mxu0
          %v609 = vpop.f32.mrb[0].mxu0
          %610 = vdwg.mxu0
          %v611 = vpack.c.bf16 %v606, %v606
          %612 = vst [vmem:[#allocation2] sm:$0xf] %v611
        $region84: #{tpu_custom_call.1} parent=55 // pred_fallthru
          _
        %v613 = vld [vmem:[%s427] sm:$0xf]
        %v614 = vld [vmem:[#allocation12] sm:$0xf]
        %v615 = vld [vmem:[#allocation12 + $0x4] sm:$0xf]
        %v616 = vld [vmem:[#allocation12 + $0x8] sm:$0xf]
        %v617 = vld [vmem:[#allocation12 + $0xc] sm:$0xf]
        %v618 = vld [vmem:[#allocation12 + $0x10] sm:$0xf]
        %v619 = vld [vmem:[#allocation12 + $0x14] sm:$0xf]
        %v620 = vld [vmem:[#allocation12 + $0x18] sm:$0xf]
        %v621 = vld [vmem:[#allocation12 + $0x1c] sm:$0xf]
        %v622 = vld [vmem:[#allocation12 + $0x20] sm:$0xf]
        %v623 = vld [vmem:[#allocation12 + $0x24] sm:$0xf]
        %v624 = vld [vmem:[#allocation12 + $0x28] sm:$0xf]
        %v625 = vld [vmem:[#allocation12 + $0x2c] sm:$0xf]
        %v626 = vld [vmem:[#allocation12 + $0x30] sm:$0xf]
        %v627 = vld [vmem:[#allocation12 + $0x34] sm:$0xf]
        %v628 = vld [vmem:[#allocation12 + $0x38] sm:$0xf]
        %v629 = vld [vmem:[#allocation12 + $0x3c] sm:$0xf]
        %v630 = vld [vmem:[%s6] sm:$0x1]
        %v632 = vlaneseq
        %v633 = vshrl.u32 %v632, 7
        %v634 = vsub.s32 0, %v633
        %v635 = vrot.slane %v630, %v634
        %v653 = vunpack.c.l.b16 %v614
        %v654 = vunpack.c.l.b16 %v615
        %v655 = vunpack.c.l.b16 %v616
        %v656 = vunpack.c.l.b16 %v617
        %v657 = vunpack.c.l.b16 %v618
        %v658 = vunpack.c.l.b16 %v619
        %v659 = vunpack.c.l.b16 %v620
        %v660 = vunpack.c.l.b16 %v621
        %v661 = vunpack.c.l.b16 %v622
        %v662 = vunpack.c.l.b16 %v623
        %v663 = vunpack.c.l.b16 %v624
        %v664 = vunpack.c.l.b16 %v625
        %v665 = vunpack.c.l.b16 %v626
        %v666 = vunpack.c.l.b16 %v627
        %v667 = vunpack.c.l.b16 %v628
        %v668 = vunpack.c.l.b16 %v629
        %v669 = vpack.c.b16 %v654, %v653
        %v670 = vpack.c.b16 %v656, %v655
        %v671 = vpack.c.b16 %v658, %v657
        %v672 = vpack.c.b16 %v660, %v659
        %v673 = vpack.c.b16 %v662, %v661
        %v674 = vpack.c.b16 %v664, %v663
        %v675 = vpack.c.b16 %v666, %v665
        %v676 = vpack.c.b16 %v668, %v667
        %685 = vmatprep.subr.bf16.mxu0 0
        %686 = vmatpush1.bf16.xpose.msra.mxu0 %v669
        %687 = vmatprep.subr.bf16.mxu0 0
        %688 = vmatpush1.bf16.xpose.msra.mxu0 %v670
        %689 = vmatprep.subr.bf16.mxu0 0
        %690 = vmatpush1.bf16.xpose.msra.mxu0 %v671
        %691 = vmatprep.subr.bf16.mxu0 0
        %692 = vmatpush1.bf16.xpose.msra.mxu0 %v672
        %693 = vmatprep.subr.bf16.mxu0 0
        %694 = vmatpush1.bf16.xpose.msra.mxu0 %v673
        %695 = vmatprep.subr.bf16.mxu0 0
        %696 = vmatpush1.bf16.xpose.msra.mxu0 %v674
        %697 = vmatprep.subr.bf16.mxu0 0
        %698 = vmatpush1.bf16.xpose.msra.mxu0 %v675
        %699 = vmatprep.subr.bf16.mxu0 0
        %700 = vmatpush1.bf16.xpose.msra.mxu0 %v676
        %701 = vmatprep.subr.bf16.mxu0 0
        %702 = vmatpush1.bf16.xpose.msra.mxu0 0
        %703 = vmatprep.subr.bf16.mxu0 0
        %704 = vmatpush1.bf16.xpose.msra.mxu0 0
        %705 = vmatprep.subr.bf16.mxu0 0
        %706 = vmatpush1.bf16.xpose.msra.mxu0 0
        %707 = vmatprep.subr.bf16.mxu0 0
        %708 = vmatpush1.bf16.xpose.msra.mxu0 0
        %709 = vmatprep.subr.bf16.mxu0 0
        %710 = vmatpush1.bf16.xpose.msra.mxu0 0
        %711 = vmatprep.subr.bf16.mxu0 0
        %712 = vmatpush1.bf16.xpose.msra.mxu0 0
        %713 = vmatprep.subr.bf16.mxu0 0
        %714 = vmatpush1.bf16.xpose.msra.mxu0 0
        %715 = vmatprep.subr.bf16.mxu0 0
        %716 = vmatpush1.bf16.xpose.msra.mxu0 0
        %717 = vmatprep.mubr.bf16.mxu0 0
        %718 = vmatmul.mubr.bf16.gmra.mrb[0].mxu0 %v613
        %v719 = vpop.f32.mrb[0].mxu0
        %v720 = vadd.f32 %v635, %v719
        %v721 = vpop.f32.mrb[0].mxu0
        %v722 = vpop.f32.mrb[0].mxu0
        %v723 = vpop.f32.mrb[0].mxu0
        %724 = vdwg.mxu0
        %v725 = vpack.c.bf16 %v720, %v720
        %v726 = vld [vmem:[%s436] sm:$0xf]
        %v727 = vld [vmem:[#allocation13] sm:$0xf]
        %v728 = vld [vmem:[#allocation13 + $0x4] sm:$0xf]
        %v729 = vld [vmem:[#allocation13 + $0x8] sm:$0xf]
        %v730 = vld [vmem:[#allocation13 + $0xc] sm:$0xf]
        %v731 = vld [vmem:[#allocation13 + $0x10] sm:$0xf]
        %v732 = vld [vmem:[#allocation13 + $0x14] sm:$0xf]
        %v733 = vld [vmem:[#allocation13 + $0x18] sm:$0xf]
        %v734 = vld [vmem:[#allocation13 + $0x1c] sm:$0xf]
        %v735 = vld [vmem:[#allocation13 + $0x20] sm:$0xf]
        %v736 = vld [vmem:[#allocation13 + $0x24] sm:$0xf]
        %v737 = vld [vmem:[#allocation13 + $0x28] sm:$0xf]
        %v738 = vld [vmem:[#allocation13 + $0x2c] sm:$0xf]
        %v739 = vld [vmem:[#allocation13 + $0x30] sm:$0xf]
        %v740 = vld [vmem:[#allocation13 + $0x34] sm:$0xf]
        %v741 = vld [vmem:[#allocation13 + $0x38] sm:$0xf]
        %v742 = vld [vmem:[#allocation13 + $0x3c] sm:$0xf]
        %v743 = vld [vmem:[%s8] sm:$0x1]
        %v745 = vlaneseq
        %v746 = vshrl.u32 %v745, 7
        %v747 = vsub.s32 0, %v746
        %v748 = vrot.slane %v743, %v747
        %v766 = vunpack.c.l.b16 %v727
        %v767 = vunpack.c.l.b16 %v728
        %v768 = vunpack.c.l.b16 %v729
        %v769 = vunpack.c.l.b16 %v730
        %v770 = vunpack.c.l.b16 %v731
        %v771 = vunpack.c.l.b16 %v732
        %v772 = vunpack.c.l.b16 %v733
        %v773 = vunpack.c.l.b16 %v734
        %v774 = vunpack.c.l.b16 %v735
        %v775 = vunpack.c.l.b16 %v736
        %v776 = vunpack.c.l.b16 %v737
        %v777 = vunpack.c.l.b16 %v738
        %v778 = vunpack.c.l.b16 %v739
        %v779 = vunpack.c.l.b16 %v740
        %v780 = vunpack.c.l.b16 %v741
        %v781 = vunpack.c.l.b16 %v742
        %v782 = vpack.c.b16 %v767, %v766
        %v783 = vpack.c.b16 %v769, %v768
        %v784 = vpack.c.b16 %v771, %v770
        %v785 = vpack.c.b16 %v773, %v772
        %v786 = vpack.c.b16 %v775, %v774
        %v787 = vpack.c.b16 %v777, %v776
        %v788 = vpack.c.b16 %v779, %v778
        %v789 = vpack.c.b16 %v781, %v780
        %798 = vmatprep.subr.bf16.mxu0 0
        %799 = vmatpush1.bf16.xpose.msra.mxu0 %v782
        %800 = vmatprep.subr.bf16.mxu0 0
        %801 = vmatpush1.bf16.xpose.msra.mxu0 %v783
        %802 = vmatprep.subr.bf16.mxu0 0
        %803 = vmatpush1.bf16.xpose.msra.mxu0 %v784
        %804 = vmatprep.subr.bf16.mxu0 0
        %805 = vmatpush1.bf16.xpose.msra.mxu0 %v785
        %806 = vmatprep.subr.bf16.mxu0 0
        %807 = vmatpush1.bf16.xpose.msra.mxu0 %v786
        %808 = vmatprep.subr.bf16.mxu0 0
        %809 = vmatpush1.bf16.xpose.msra.mxu0 %v787
        %810 = vmatprep.subr.bf16.mxu0 0
        %811 = vmatpush1.bf16.xpose.msra.mxu0 %v788
        %812 = vmatprep.subr.bf16.mxu0 0
        %813 = vmatpush1.bf16.xpose.msra.mxu0 %v789
        %814 = vmatprep.subr.bf16.mxu0 0
        %815 = vmatpush1.bf16.xpose.msra.mxu0 0
        %816 = vmatprep.subr.bf16.mxu0 0
        %817 = vmatpush1.bf16.xpose.msra.mxu0 0
        %818 = vmatprep.subr.bf16.mxu0 0
        %819 = vmatpush1.bf16.xpose.msra.mxu0 0
        %820 = vmatprep.subr.bf16.mxu0 0
        %821 = vmatpush1.bf16.xpose.msra.mxu0 0
        %822 = vmatprep.subr.bf16.mxu0 0
        %823 = vmatpush1.bf16.xpose.msra.mxu0 0
        %824 = vmatprep.subr.bf16.mxu0 0
        %825 = vmatpush1.bf16.xpose.msra.mxu0 0
        %826 = vmatprep.subr.bf16.mxu0 0
        %827 = vmatpush1.bf16.xpose.msra.mxu0 0
        %828 = vmatprep.subr.bf16.mxu0 0
        %829 = vmatpush1.bf16.xpose.msra.mxu0 0
        %830 = vmatprep.mubr.bf16.mxu0 0
        %831 = vmatmul.mubr.bf16.gmra.mrb[0].mxu0 %v726
        %v832 = vpop.f32.mrb[0].mxu0
        %v833 = vadd.f32 %v748, %v832
        %v834 = vpop.f32.mrb[0].mxu0
        %v835 = vpop.f32.mrb[0].mxu0
        %v836 = vpop.f32.mrb[0].mxu0
        %837 = vdwg.mxu0
        %v838 = vpack.c.bf16 %v833, %v833
        %v839 = vld [vmem:[#allocation2] sm:$0xf]
        %840 = vmatprep.subr.bf16.mxu0 0
        %841 = vmatpush1.bf16.xpose.msra.mxu0 %v725
        %842 = vmatprep.subr.bf16.mxu0 0
        %843 = vmatpush1.bf16.xpose.msra.mxu0 0
        %844 = vmatprep.subr.bf16.mxu0 0
        %845 = vmatpush1.bf16.xpose.msra.mxu0 0
        %846 = vmatprep.subr.bf16.mxu0 0
        %847 = vmatpush1.bf16.xpose.msra.mxu0 0
        %848 = vmatprep.subr.bf16.mxu0 0
        %849 = vmatpush1.bf16.xpose.msra.mxu0 0
        %850 = vmatprep.subr.bf16.mxu0 0
        %851 = vmatpush1.bf16.xpose.msra.mxu0 0
        %852 = vmatprep.subr.bf16.mxu0 0
        %853 = vmatpush1.bf16.xpose.msra.mxu0 0
        %854 = vmatprep.subr.bf16.mxu0 0
        %855 = vmatpush1.bf16.xpose.msra.mxu0 0
        %856 = vmatprep.subr.bf16.mxu0 0
        %857 = vmatpush1.bf16.xpose.msra.mxu0 0
        %858 = vmatprep.subr.bf16.mxu0 0
        %859 = vmatpush1.bf16.xpose.msra.mxu0 0
        %860 = vmatprep.subr.bf16.mxu0 0
        %861 = vmatpush1.bf16.xpose.msra.mxu0 0
        %862 = vmatprep.subr.bf16.mxu0 0
        %863 = vmatpush1.bf16.xpose.msra.mxu0 0
        %864 = vmatprep.subr.bf16.mxu0 0
        %865 = vmatpush1.bf16.xpose.msra.mxu0 0
        %866 = vmatprep.subr.bf16.mxu0 0
        %867 = vmatpush1.bf16.xpose.msra.mxu0 0
        %868 = vmatprep.subr.bf16.mxu0 0
        %869 = vmatpush1.bf16.xpose.msra.mxu0 0
        %870 = vmatprep.subr.bf16.mxu0 0
        %871 = vmatpush1.bf16.xpose.msra.mxu0 0
        %872 = vmatprep.mubr.bf16.mxu0 0
        %873 = vmatmul.mubr.bf16.gmra.mrb[0].mxu0 %v839
        %v874 = vpop.f32.mrb[0].mxu0
        %v875 = vadd.f32 0.0, %v874
        %v876 = vpop.f32.mrb[0].mxu0
        %v877 = vpop.f32.mrb[0].mxu0
        %v878 = vpop.f32.mrb[0].mxu0
        %879 = vdwg.mxu0
        %v880 = vmax.f32 %v875, 0.0
        %v881 = vld [vmem:[#allocation3] sm:$0xff]
        %v882 = vpack.c.bf16 %v880, %v880
        %vm883 = vcmask 64512
        %v885 = vsel %vm883, %v882, 0
        %vm887 = vcmask 1043456
        %v889 = vsel %vm887, %v838, 0
        %891 = vmatprep.subr.bf16.mxu0 0
        %892 = vmatpush1.bf16.msra.mxu0 %v889
        %893 = vmatprep.subr.bf16.mxu0 0
        %894 = vmatpush1.bf16.msra.mxu0 0
        %895 = vmatprep.subr.bf16.mxu0 0
        %896 = vmatpush1.bf16.msra.mxu0 0
        %897 = vmatprep.subr.bf16.mxu0 0
        %898 = vmatpush1.bf16.msra.mxu0 0
        %899 = vmatprep.subr.bf16.mxu0 0
        %900 = vmatpush1.bf16.msra.mxu0 0
        %901 = vmatprep.subr.bf16.mxu0 0
        %902 = vmatpush1.bf16.msra.mxu0 0
        %903 = vmatprep.subr.bf16.mxu0 0
        %904 = vmatpush1.bf16.msra.mxu0 0
        %905 = vmatprep.subr.bf16.mxu0 0
        %906 = vmatpush1.bf16.msra.mxu0 0
        %907 = vmatprep.subr.bf16.mxu0 0
        %908 = vmatpush1.bf16.msra.mxu0 0
        %909 = vmatprep.subr.bf16.mxu0 0
        %910 = vmatpush1.bf16.msra.mxu0 0
        %911 = vmatprep.subr.bf16.mxu0 0
        %912 = vmatpush1.bf16.msra.mxu0 0
        %913 = vmatprep.subr.bf16.mxu0 0
        %914 = vmatpush1.bf16.msra.mxu0 0
        %915 = vmatprep.subr.bf16.mxu0 0
        %916 = vmatpush1.bf16.msra.mxu0 0
        %917 = vmatprep.subr.bf16.mxu0 0
        %918 = vmatpush1.bf16.msra.mxu0 0
        %919 = vmatprep.subr.bf16.mxu0 0
        %920 = vmatpush1.bf16.msra.mxu0 0
        %921 = vmatprep.subr.bf16.mxu0 0
        %922 = vmatpush1.bf16.msra.mxu0 0
        %923 = vmatprep.mubr.bf16.mxu0 0
        %924 = vmatmul.mubr.bf16.gmra.mrb[0].mxu0 %v885
        %v925 = vpop.f32.mrb[0].mxu0
        %v926 = vadd.f32 0.0, %v925
        %v927 = vpop.f32.mrb[0].mxu0
        %v928 = vpop.f32.mrb[0].mxu0
        %v929 = vpop.f32.mrb[0].mxu0
        %930 = vdwg.mxu0
        %v931 = vadd.f32 %v881, %v926
        %932 = vst [vmem:[#allocation3] sm:$0xff] %v931
        // Predicated region
        $region85: #{tpu_custom_call.1} parent=55 // pred_check
          %p933 = pneg %p494
        $region86: #{tpu_custom_call.1} parent=55 // pred_check_branch
          %935 = sbr.rel (%p933) target = $region88
        $region87: #{tpu_custom_call.1} parent=55 // pred_region
          %v936 = vld [vmem:[#allocation3] sm:$0xff]
          %937 = vst [vmem:[%s492] sm:$0xff] %v936
        $region88: #{tpu_custom_call.1} parent=55 // pred_fallthru
          _
        %s938 = sand.u32 %s270, 1
        %s939 = scalar_lea.sflag [#allocation6], %s938
        %s940 = sand.u32 %s270, 1
        %s941 = smul.addr %s940, 8
        %s942 = scalar_lea.vmem [#allocation15], %s941
        // Predicated region
        $region89: #{tpu_custom_call.1} parent=55 // pred_check
          %p943 = pneg %p280
        $region90: #{tpu_custom_call.1} parent=55 // pred_check_branch
          %945 = sbr.rel (%p943) target = $region92
        $region91: #{tpu_custom_call.1} parent=55 // pred_region
          %s947 = ssub.s32 128, 128
          %948 = vsyncadd %s939, %s947
          %s949 = sadd.s32 %s37, %s36
          %s950 = smul.addr %s949, 128
          %s951 = scalar_lea.hbm %s9, %s950
          %s953 = sshll.u32 %s942, 4
          %s954 = int_to_ptr.vmem [resolvable:$true] %s953
          %956 = dma.vmem_to_hbm [thread:$0]  %s954, 128, %s951, %s939
        $region92: #{tpu_custom_call.1} parent=55 // pred_fallthru
          _
      $region56: #{tpu_custom_call.1} parent=5 // pred_fallthru
        _
      %p957 = scmp.le.s32.totalorder 2, %s26
      // Predicated region
      $region93: #{tpu_custom_call.1} parent=5 // pred_check
        %p958 = pneg %p957
      $region94: #{tpu_custom_call.1} parent=5 // pred_check_branch
        %960 = sbr.rel (%p958) target = $region96
      $region95: #{tpu_custom_call.1} parent=5 // pred_region
        %s961 = ssub.s32 %s26, 2
        // Predicated region
        $region97: #{tpu_custom_call.1} parent=95 // pred_check
          %p962 = pneg %p286
        $region98: #{tpu_custom_call.1} parent=95 // pred_check_branch
          %964 = sbr.rel (%p962) target = $region100
        $region99: #{tpu_custom_call.1} parent=95 // pred_region
          %s965 = sand.u32 %s271, 1
          %s966 = scalar_lea.sflag [#allocation6], %s965
          %s967 = sand.u32 %s271, 1
          %s968 = smul.addr %s967, 8
          %s969 = scalar_lea.vmem [#allocation15], %s968
          %970 = dma.done %s966, 128
        $region100: #{tpu_custom_call.1} parent=95 // pred_fallthru
          _
      $region96: #{tpu_custom_call.1} parent=5 // pred_fallthru
        _
    $region6: #{tpu_custom_call.1} parent=1 // loop_footer
      %s30 = sadd.s32 1, %s26
    $region7: #{tpu_custom_call.1} parent=1 // loop_footer_branch
      %25 = sbr.rel target = $region3
    $region8: #{tpu_custom_call.1} parent=1 // loop_exit
      _
    %971 = vsyncpa [#allocation5], 1
    %s972 = scalar_lea.sflag [#allocation5], 1
    %973 = vsyncpa %s972, 1
    %974 = vsyncpa [#allocation8], 1
    %s975 = scalar_lea.sflag [#allocation8], 1
    %976 = vsyncpa %s975, 1
    %977 = vsyncpa [#allocation11], 1
    %978 = vsyncpa [#allocation14], 1
    %979 = vsyncpa [#allocation6], 1
    %s980 = scalar_lea.sflag [#allocation6], 1
    %981 = vsyncpa %s980, 1

</llo_original>
